<compile_context>
chip_gen: v5e
topology: v5e:2x2
jax: 0.10.0
libtpu: 0.0.40
codegen_flags: <defaults>
</compile_context>

<pallas_src>
import jax
import jax.numpy as jnp
from jax.experimental import pallas as pl
from jax.experimental.pallas import tpu as pltpu


def _round_up(v, m):
    return ((v + m - 1) // m) * m


def _linear_kernel(x_ref, w_ref, b_ref, o_ref):
    # x_ref: (TM, K)   VMEM  — streamed batch tile (K = in_dim, full extent)
    # w_ref: (K, N)    VMEM  — pre-transposed torch weight, resident across steps
    # b_ref: (1, N)    VMEM  f32, resident
    # o_ref: (TM, N)   VMEM
    acc = jnp.dot(x_ref[...], w_ref[...], preferred_element_type=jnp.float32)
    o_ref[...] = (acc + b_ref[...]).astype(o_ref.dtype)


def prepare_linear_params(w3, b3):
    """One-time prep (hoisted out of the per-forward path).

    w3: (out_dim, in_dim) torch Linear layout, b3: (out_dim,)
    Returns w_t: (in_dim, out_dim), b_2d: (1, out_dim) f32.
    """
    return jnp.asarray(w3).T.astype(jnp.float32), jnp.asarray(b3).astype(
        jnp.float32).reshape(1, -1)


def prediction_mlp_forward(x, w_t, b_2d, *, tm_max=2048):
    """Pallas equivalent of prediction_MLP.forward: out = x @ W3.T + b3.

    x   : (N, in_dim)
    w_t : (in_dim, out_dim)   pre-transposed weight (see prepare_linear_params)
    b_2d: (1, out_dim) f32
    """
    n, in_dim = x.shape
    k, out_dim = w_t.shape
    assert k == in_dim, "weight / activation dim mismatch"
    out_dtype = x.dtype

    # Batch tile: multiple of 8 sublanes (f32 operands), capped by tm_max.
    tm = min(tm_max, _round_up(n, 8))
    if n <= tm and n >= 16:
        # Keep >= 2 grid steps so dimension_semantics=("parallel",) can shard
        # across the two TensorCores on v7x.
        tm = _round_up(-(-n // 2), 8)
    grid = pl.cdiv(n, tm)

    itemsize = jnp.dtype(x.dtype).itemsize
    bytes_accessed = (n * in_dim * itemsize
                      + in_dim * out_dim * 4
                      + out_dim * 4
                      + n * out_dim * jnp.dtype(out_dtype).itemsize)

    return pl.pallas_call(
        _linear_kernel,
        out_shape=jax.ShapeDtypeStruct((n, out_dim), out_dtype),
        grid=(grid,),
        in_specs=[
            # x: streamed batch tiles; in_dim is a full-extent last dim.
            pl.BlockSpec((tm, in_dim), lambda i: (i, 0)),
            # weight / bias: VMEM-resident across all grid steps.
            pl.BlockSpec((in_dim, out_dim), lambda i: (0, 0)),
            pl.BlockSpec((1, out_dim), lambda i: (0, 0)),
        ],
        out_specs=pl.BlockSpec((tm, out_dim), lambda i: (i, 0)),
        compiler_params=pltpu.CompilerParams(
            dimension_semantics=("parallel",),
        ),
        cost_estimate=pl.CostEstimate(
            flops=2 * n * in_dim * out_dim,
            transcendentals=0,
            bytes_accessed=bytes_accessed,
        ),
    )(x, w_t, b_2d)


def init_params(key, in_dim=64, hidden_dim=64, out_dim=64):
    """Deterministic parameter init mirroring the module's __init__ shapes.

    layer1 / layer2 params are created for shape-fidelity but are unused in
    forward (exactly as in the PyTorch module).
    """
    ks = jax.random.split(key, 4)
    params = {
        # layer1: Linear(in_dim, hidden_dim) + BatchNorm1d(hidden_dim)  (unused)
        "w1": jax.random.normal(ks[0], (hidden_dim, in_dim), jnp.float32) * 0.02,
        "b1": jnp.zeros((hidden_dim,), jnp.float32),
        "bn_gamma": jnp.ones((hidden_dim,), jnp.float32),
        "bn_beta": jnp.zeros((hidden_dim,), jnp.float32),
        # layer2: Linear(hidden_dim, out_dim)  (unused)
        "w2": jax.random.normal(ks[1], (out_dim, hidden_dim), jnp.float32) * 0.02,
        "b2": jnp.zeros((out_dim,), jnp.float32),
        # layer3: Linear(in_dim, out_dim)  -- the only layer used in forward
        "w3": jax.random.normal(ks[2], (out_dim, in_dim), jnp.float32) * 0.02,
        "b3": jax.random.normal(ks[3], (out_dim,), jnp.float32) * 0.01,
    }
    return params


if __name__ == "__main__":
    key = jax.random.PRNGKey(0)
    in_dim, hidden_dim, out_dim = 64, 64, 64

    params = init_params(key, in_dim, hidden_dim, out_dim)
    # One-time prep (outside the hot path).
    w_t, b_2d = prepare_linear_params(params["w3"], params["b3"])

    # Small-batch check (module-default shapes, single grid step).
    batch = 8
    x = jax.random.normal(jax.random.fold_in(key, 123), (batch, in_dim),
                          jnp.float32)
    out = prediction_mlp_forward(x, w_t, b_2d)
    out = jax.block_until_ready(out)
    ref = x @ params["w3"].T + params["b3"]
    assert out.shape == (batch, out_dim)
    assert jnp.allclose(out, ref, atol=1e-4, rtol=1e-4), "mismatch vs reference"

    # Larger, non-divisible batch: exercises the 2-step parallel grid and the
    # write-masked trailing partial block (no padded HBM round trips).
    batch2 = 1000
    x2 = jax.random.normal(jax.random.fold_in(key, 456), (batch2, in_dim),
                           jnp.float32)
    out2 = prediction_mlp_forward(x2, w_t, b_2d)
    out2 = jax.block_until_ready(out2)
    ref2 = x2 @ params["w3"].T + params["b3"]
    assert out2.shape == (batch2, out_dim)
    assert jnp.allclose(out2, ref2, atol=1e-4, rtol=1e-4), \
        "mismatch vs reference (tiled / partial block)"

    print("KERNEL_OK")
</pallas_src>

<mosaic_0001>
module attributes {stable_mosaic.version = 11 : i64} {
  func.func @_linear_kernel(%arg0: i32, %arg1: memref<8x64xf32, #tpu.memory_space<vmem>>, %arg2: memref<64x64xf32, #tpu.memory_space<vmem>>, %arg3: memref<1x64xf32, #tpu.memory_space<vmem>>, %arg4: memref<8x64xf32, #tpu.memory_space<vmem>>) attributes {dimension_semantics = [#tpu.dimension_semantics<parallel>], iteration_bounds = array<i64: 1>, scalar_prefetch = 0 : i64, scratch_operands = 0 : i64, tpu.core_type = #tpu.core_type<tc>, window_params = [{transform_indices = @transform_0, window_bounds = array<i64: 8, 64>}, {pipeline_mode = #tpu.pipeline_mode<synchronous>, transform_indices = @transform_1, window_bounds = array<i64: 64, 64>}, {pipeline_mode = #tpu.pipeline_mode<synchronous>, transform_indices = @transform_2, window_bounds = array<i64: 1, 64>}, {transform_indices = @transform_3, window_bounds = array<i64: 8, 64>}]} {
    %c0 = arith.constant 0 : index
    %c0_0 = arith.constant 0 : index
    %0 = vector.load %arg1[%c0, %c0_0] : memref<8x64xf32, #tpu.memory_space<vmem>>, vector<8x64xf32>
    %c0_1 = arith.constant 0 : index
    %c0_2 = arith.constant 0 : index
    %1 = vector.load %arg2[%c0_1, %c0_2] : memref<64x64xf32, #tpu.memory_space<vmem>>, vector<64x64xf32>
    %cst = arith.constant dense<0.000000e+00> : vector<8x64xf32>
    %2 = tpu.matmul %0, %1, %cst {dimension_numbers = #tpu.dot_dimension_numbers<[1], [0], [0], [1], [0, 0, 1, 1], [], []>} : vector<8x64xf32>, vector<64x64xf32>, vector<8x64xf32> -> vector<8x64xf32>
    %c0_3 = arith.constant 0 : index
    %c0_4 = arith.constant 0 : index
    %3 = vector.load %arg3[%c0_3, %c0_4] : memref<1x64xf32, #tpu.memory_space<vmem>>, vector<1x64xf32>
    %4 = vector.broadcast %3 : vector<1x64xf32> to vector<8x64xf32>
    %5 = arith.addf %2, %4 : vector<8x64xf32>
    %c0_5 = arith.constant 0 : index
    %c0_6 = arith.constant 0 : index
    %6 = vector.load %arg4[%c0_5, %c0_6] : memref<8x64xf32, #tpu.memory_space<vmem>>, vector<8x64xf32>
    tpu.vector_store %arg4[%c0_5, %c0_6], %5 {strides = array<i32>} : memref<8x64xf32, #tpu.memory_space<vmem>>, vector<8x64xf32>,
    return
  }
  func.func @transform_0(%arg0: i32) -> (i32, i32) {
    %c0_i32 = arith.constant 0 : i32
    %c0_i32_0 = arith.constant 0 : i32
    return %arg0, %c0_i32 : i32, i32
  }
  func.func @transform_1(%arg0: i32) -> (i32, i32) {
    %c0_i32 = arith.constant 0 : i32
    %c0_i32_0 = arith.constant 0 : i32
    %c0_i32_1 = arith.constant 0 : i32
    return %c0_i32, %c0_i32_0 : i32, i32
  }
  func.func @transform_2(%arg0: i32) -> (i32, i32) {
    %c0_i32 = arith.constant 0 : i32
    %c0_i32_0 = arith.constant 0 : i32
    %c0_i32_1 = arith.constant 0 : i32
    return %c0_i32, %c0_i32_0 : i32, i32
  }
  func.func @transform_3(%arg0: i32) -> (i32, i32) {
    %c0_i32 = arith.constant 0 : i32
    %c0_i32_0 = arith.constant 0 : i32
    return %arg0, %c0_i32 : i32, i32
  }
}

</mosaic_0001>

<llo_original>
// kernel: tpu_custom_call.1
$region0: #{tpu_custom_call.1}
  #allocation0 [shape = 'u32[]', space=smem, size = 0x4, offset = 0x4, fixed_abs, tag = 'smem constant byte address 0x4 - core index']
  #allocation1 [shape = 'u32[72,128]{1,0:T(1,128)}', space=vmem, size = 0x9000, scoped, tag = 'internal scratch']
  %s0 = inlined_call_operand.hbm [shape: f32[8,64], index: 0, kind: input, shape index: {}]
  %s1 = inlined_call_operand.hbm [shape: f32[64,64], index: 1, kind: input, shape index: {}]
  %s2 = inlined_call_operand.vmem [shape: f32[1,64], index: 2, kind: input, shape index: {}]
  %s3 = inlined_call_operand.hbm [shape: f32[8,64], index: 3, kind: output, shape index: {}]
  %s4 = sld [smem:[#allocation0]]
  $region30: #{tpu_custom_call.1} parent=0
    _
  %s6 = ssub.s32 1, %s4
  %s7 = scalar_select 0, %s6, %s4
  $region1: #{tpu_custom_call.1} parent=0
    #allocation2 [shape = 'u8[4096]{0}', space=vmem, size = 0x1000, scoped, tag = 'input window, operand 0, single buffered']
    #allocation3 [shape = 's32[1]{0}', space=sflag, size = 0x4, scoped, tag = 'scoped memory for tpu_custom_call.1']
    #allocation4 [shape = 's32[1]{0}', space=sflag, size = 0x4, scoped, tag = 'scoped memory for tpu_custom_call.1']
    #allocation5 [shape = 'u8[32768]{0}', space=vmem, size = 0x8000, scoped, tag = 'input window, operand 1, single buffered']
    #allocation6 [shape = 's32[1]{0}', space=sflag, size = 0x4, scoped, tag = 'scoped memory for tpu_custom_call.1']
    #allocation7 [shape = 'u8[4096]{0}', space=vmem, size = 0x1000, scoped, tag = 'output window, operand 0, single buffered']
    %8 = vsyncpa [#allocation3], 0
    %9 = vsyncpa [#allocation6], 0
    %10 = vsyncpa [#allocation4], 0
    // Predicated region
    $region2: #{tpu_custom_call.1} parent=1 // pred_check
      _
    $region3: #{tpu_custom_call.1} parent=1 // pred_check_branch
      %12 = sbr.rel (0) target = $region5
    $region4: #{tpu_custom_call.1} parent=1 // pred_region
      %14 = vsyncadd [#allocation3], 0
      %s16 = sshll.u32 %s0, 4
      %s17 = int_to_ptr.hbm [resolvable:$true] %s16
      %s18 = sshll.u32 [#allocation2], 4
      %s19 = int_to_ptr.vmem [resolvable:$true] %s18
      %21 = dma.hbm_to_vmem [thread:$0]  %s17, 128, %s19, [#allocation3]
    $region5: #{tpu_custom_call.1} parent=1 // pred_fallthru
      _
    // Predicated region
    $region6: #{tpu_custom_call.1} parent=1 // pred_check
      _
    $region7: #{tpu_custom_call.1} parent=1 // pred_check_branch
      %23 = sbr.rel (0) target = $region9
    $region8: #{tpu_custom_call.1} parent=1 // pred_region
      %25 = vsyncadd [#allocation6], 0
      %s26 = sshll.u32 %s1, 4
      %s27 = int_to_ptr.hbm [resolvable:$true] %s26
      %s28 = sshll.u32 [#allocation5], 4
      %s29 = int_to_ptr.vmem [resolvable:$true] %s28
      %34 = dma.hbm_to_vmem [thread:$0]  %s27, 1024, %s29, [#allocation6], 128, 128, 8
    $region9: #{tpu_custom_call.1} parent=1 // pred_fallthru
      _
    // Predicated region
    $region10: #{tpu_custom_call.1} parent=1 // pred_check
      _
    $region11: #{tpu_custom_call.1} parent=1 // pred_check_branch
      %36 = sbr.rel (0) target = $region13
    $region12: #{tpu_custom_call.1} parent=1 // pred_region
      _
    $region13: #{tpu_custom_call.1} parent=1 // pred_fallthru
      _
    // Predicated region
    $region14: #{tpu_custom_call.1} parent=1 // pred_check
      _
    $region15: #{tpu_custom_call.1} parent=1 // pred_check_branch
      %38 = sbr.rel (0) target = $region17
    $region16: #{tpu_custom_call.1} parent=1 // pred_region
      %40 = dma.done [#allocation3], 128
    $region17: #{tpu_custom_call.1} parent=1 // pred_fallthru
      _
    // Predicated region
    $region18: #{tpu_custom_call.1} parent=1 // pred_check
      _
    $region19: #{tpu_custom_call.1} parent=1 // pred_check_branch
      %42 = sbr.rel (0) target = $region21
    $region20: #{tpu_custom_call.1} parent=1 // pred_region
      %44 = dma.done [#allocation6], 1024
    $region21: #{tpu_custom_call.1} parent=1 // pred_fallthru
      _
    %v45 = vld [vmem:[#allocation2] sm:$0xff]
    %v46 = vld [vmem:[#allocation5] sm:$0xff]
    %v47 = vld [vmem:[#allocation5 + $0x8] sm:$0xff]
    %v48 = vld [vmem:[#allocation5 + $0x10] sm:$0xff]
    %v49 = vld [vmem:[#allocation5 + $0x18] sm:$0xff]
    %v50 = vld [vmem:[#allocation5 + $0x20] sm:$0xff]
    %v51 = vld [vmem:[#allocation5 + $0x28] sm:$0xff]
    %v52 = vld [vmem:[#allocation5 + $0x30] sm:$0xff]
    %v53 = vld [vmem:[#allocation5 + $0x38] sm:$0xff]
    %v54 = vld [vmem:[%s2] sm:$0x1]
    %v56 = vperm.slane %v54, 0
    %vm58 = vcmask 523264
    %v60 = vsel %vm58, %v45, 0
    %62 = vmatpush.msra.mxu0 0.0
    %63 = vmatpush.msra.mxu0 0.0
    %64 = vmatpush.msra.mxu0 0.0
    %65 = vmatpush.msra.mxu0 0.0
    %66 = vmatpush.msra.mxu0 0.0
    %67 = vmatpush.msra.mxu0 0.0
    %68 = vmatpush.msra.mxu0 0.0
    %69 = vmatpush.msra.mxu0 0.0
    %70 = vmatpush.msra.mxu0 %v53
    %71 = vmatpush.msra.mxu0 %v52
    %72 = vmatpush.msra.mxu0 %v51
    %73 = vmatpush.msra.mxu0 %v50
    %74 = vmatpush.msra.mxu0 %v49
    %75 = vmatpush.msra.mxu0 %v48
    %76 = vmatpush.msra.mxu0 %v47
    %77 = vmatpush.msra.mxu0 %v46
    %78 = vmatmul.f32.gmra.mxu0 %v60
    %v79 = vpop.f32.mrf.mxu0
    %v80 = vadd.f32 %v56, %v79
    %81 = vdwg.mxu0
    %82 = vst.msk [vmem:[#allocation7] sm:$0xff] %vm58, %v80
    // Predicated region
    $region22: #{tpu_custom_call.1} parent=1 // pred_check
      _
    $region23: #{tpu_custom_call.1} parent=1 // pred_check_branch
      %84 = sbr.rel (0) target = $region25
    $region24: #{tpu_custom_call.1} parent=1 // pred_region
      %86 = vsyncadd [#allocation4], 0
      %s88 = sshll.u32 [#allocation7], 4
      %s89 = int_to_ptr.vmem [resolvable:$true] %s88
      %s90 = sshll.u32 %s3, 4
      %s91 = int_to_ptr.hbm [resolvable:$true] %s90
      %93 = dma.vmem_to_hbm [thread:$0]  %s89, 128, %s91, [#allocation4]
    $region25: #{tpu_custom_call.1} parent=1 // pred_fallthru
      _
    // Predicated region
    $region26: #{tpu_custom_call.1} parent=1 // pred_check
      _
    $region27: #{tpu_custom_call.1} parent=1 // pred_check_branch
      %95 = sbr.rel (0) target = $region29
    $region28: #{tpu_custom_call.1} parent=1 // pred_region
      %97 = dma.done [#allocation4], 128
    $region29: #{tpu_custom_call.1} parent=1 // pred_fallthru
      _
    %98 = vsyncpa [#allocation3], 1
    %99 = vsyncpa [#allocation6], 1
    %100 = vsyncpa [#allocation4], 1

</llo_original>
